<compile_context>
chip_gen: v5e
topology: v5e:2x2
jax: 0.10.0
libtpu: 0.0.40
codegen_flags: <defaults>
</compile_context>

<pallas_src>
import functools

import jax
import jax.numpy as jnp
from jax.experimental import pallas as pl
from jax.experimental.pallas import tpu as pltpu

LEAKY_SLOPE = 0.01   # nn.LeakyReLU default
BN_EPS = 1e-5        # nn.BatchNorm2d default
LANE = 128


def _round_up(x, m):
    return (x + m - 1) // m * m


def _maybe_lane_pad(c):
    # Lane-dense (128) padding only pays when the width is already near a lane;
    # at tiny widths the extra HBM traffic dominates any masked-store penalty.
    # (Full-width blocks satisfy the BlockSpec divisibility rule regardless.)
    return _round_up(c, LANE) if c >= 64 else c


# ---------------------------------------------------------------------------
# Kernels
# ---------------------------------------------------------------------------
def _conv1_stats_kernel(pat_ref, w1_ref, h1_ref, st_ref):
    """conv1 (3x3 stride-2 via im2col GEMM, bf16 MXU) + per-tile sum / sumsq (f32)."""
    h = jnp.dot(pat_ref[...], w1_ref[...], preferred_element_type=jnp.float32)
    h1_ref[...] = h.astype(h1_ref.dtype)
    # Padded rows of `pat` are zero -> contribute exactly zero to both partials.
    st_ref[0:1, :] = jnp.sum(h, axis=0, keepdims=True)
    st_ref[1:2, :] = jnp.sum(h * h, axis=0, keepdims=True)
    # Rows 2..7 of st_ref are intentionally left unwritten (never read).


def _bn1_conv2_stats_kernel(h1_ref, p1_ref, w2_ref, h2_ref, st_ref, *, n_valid_rows):
    """bn1 (folded scale/shift, f32) + LeakyReLU + conv2 (1x1 bf16 GEMM) + stats."""
    a = h1_ref[...].astype(jnp.float32) * p1_ref[0:1, :] + p1_ref[1:2, :]
    a = jnp.where(a >= 0, a, LEAKY_SLOPE * a)
    h = jnp.dot(a.astype(w2_ref.dtype), w2_ref[...],
                preferred_element_type=jnp.float32)
    h2_ref[...] = h.astype(h2_ref.dtype)

    tile_rows = h1_ref.shape[0]
    row0 = pl.program_id(0) * tile_rows
    is_full = row0 + tile_rows <= n_valid_rows

    @pl.when(is_full)
    def _():
        # Hot path: no row mask.
        st_ref[0:1, :] = jnp.sum(h, axis=0, keepdims=True)
        st_ref[1:2, :] = jnp.sum(h * h, axis=0, keepdims=True)

    @pl.when(jnp.logical_not(is_full))
    def _():
        # Only the last (partial) tile pays for the iota/mask.
        rid = row0 + jax.lax.broadcasted_iota(jnp.int32, h.shape, 0)
        hm = jnp.where(rid < n_valid_rows, h, 0.0)
        st_ref[0:1, :] = jnp.sum(hm, axis=0, keepdims=True)
        st_ref[1:2, :] = jnp.sum(hm * hm, axis=0, keepdims=True)


# ---------------------------------------------------------------------------
# Host-side BN fold (f32)
# ---------------------------------------------------------------------------
def _fold_bn(stats, n_rows, gamma, beta, c_pad):
    """Reduce per-tile (sum, sumsq) partials into per-channel (scale, shift)."""
    st = stats.reshape(-1, 8, c_pad)
    total = st[:, 0, :].sum(axis=0)
    totsq = st[:, 1, :].sum(axis=0)
    mean = total / n_rows
    var = jnp.maximum(totsq / n_rows - mean * mean, 0.0)   # biased var (training BN)
    g = jnp.zeros((c_pad,), jnp.float32).at[:gamma.shape[0]].set(gamma)
    b = jnp.zeros((c_pad,), jnp.float32).at[:beta.shape[0]].set(beta)
    scale = g * jax.lax.rsqrt(var + BN_EPS)   # padded cols: gamma=0 -> scale=0
    shift = b - mean * scale                  # padded cols: beta=0  -> shift=0
    return scale, shift


# ---------------------------------------------------------------------------
# Wrapper
# ---------------------------------------------------------------------------
def basic_block_pallas(x, w1, g1, b1, w2, g2, b2, *, tile_rows=2048):
    """x: [N, Cin, H, W] float32 (NCHW).  Returns [N, planes, Ho, Wo] float32."""
    N, Cin, H, W = x.shape
    mid = w1.shape[0]
    planes = w2.shape[0]
    Ho = (H + 2 - 3) // 2 + 1
    Wo = (W + 2 - 3) // 2 + 1
    R = N * Ho * Wo

    # Reflection pad + im2col (pure index shuffling) in bf16 so the 9x slab
    # streamed into Pass A is half the bytes.
    # TODO(synk): fuse the im2col into Pass A as 9 per-tap GEMMs over a padded
    # NHWC slab (memory_space=pl.ANY + strided reads) to avoid materializing it.
    xb = x.astype(jnp.bfloat16)
    xp = jnp.pad(xb, ((0, 0), (0, 0), (1, 1), (1, 1)), mode="reflect")
    rows = []
    for kh in range(3):
        cols = []
        for kw in range(3):
            cols.append(xp[:, :, kh:kh + 2 * Ho:2, kw:kw + 2 * Wo:2])  # [N,Cin,Ho,Wo]
        rows.append(jnp.stack(cols, axis=-1))
    pat = jnp.stack(rows, axis=-2)                               # [N,Cin,Ho,Wo,3,3]
    pat = jnp.transpose(pat, (0, 2, 3, 1, 4, 5)).reshape(R, Cin * 9)

    K1 = Cin * 9
    K1p = _maybe_lane_pad(K1)
    C1 = _maybe_lane_pad(mid)
    C2 = _maybe_lane_pad(planes)

    # Row tiling: multiple of 16 (bf16 sublane packing), large tiles to amortize
    # per-step overhead, and >= 2 grid steps so the "parallel" axis can shard
    # across both v7x TensorCores.
    TR = min(tile_rows, _round_up(R, 16))
    if _round_up(R, TR) // TR < 2 and TR >= 32:
        TR = _round_up((TR + 1) // 2, 16)
    Rp = _round_up(R, TR)
    nt = Rp // TR

    f32, bf16 = jnp.float32, jnp.bfloat16
    pat_p = jnp.zeros((Rp, K1p), bf16).at[:R, :K1].set(pat)
    w1_mat = jnp.zeros((K1p, C1), bf16).at[:K1, :mid].set(
        w1.reshape(mid, K1).T.astype(bf16))
    w2_mat = jnp.zeros((C1, C2), bf16).at[:mid, :planes].set(
        w2.reshape(planes, mid).T.astype(bf16))

    cp = pltpu.CompilerParams(dimension_semantics=("parallel",),
                              vmem_limit_bytes=48 * 1024 * 1024)

    # ---- Pass A: conv1 + bn1 partial stats -----------------------------------
    h1_p, st1 = pl.pallas_call(
        _conv1_stats_kernel,
        grid=(nt,),
        in_specs=[pl.BlockSpec((TR, K1p), lambda i: (i, 0)),
                  pl.BlockSpec((K1p, C1), lambda i: (0, 0))],
        out_specs=[pl.BlockSpec((TR, C1), lambda i: (i, 0)),
                   pl.BlockSpec((8, C1), lambda i: (i, 0))],
        out_shape=[jax.ShapeDtypeStruct((Rp, C1), bf16),
                   jax.ShapeDtypeStruct((nt * 8, C1), f32)],
        compiler_params=cp,
    )(pat_p, w1_mat)
    scale1, shift1 = _fold_bn(st1, R, g1, b1, C1)
    p1 = jnp.zeros((8, C1), f32).at[0].set(scale1).at[1].set(shift1)

    # ---- Pass B: bn1 + LeakyReLU + conv2 + bn2 partial stats ------------------
    kern_b = functools.partial(_bn1_conv2_stats_kernel, n_valid_rows=R)
    h2_p, st2 = pl.pallas_call(
        kern_b,
        grid=(nt,),
        in_specs=[pl.BlockSpec((TR, C1), lambda i: (i, 0)),
                  pl.BlockSpec((8, C1), lambda i: (0, 0)),
                  pl.BlockSpec((C1, C2), lambda i: (0, 0))],
        out_specs=[pl.BlockSpec((TR, C2), lambda i: (i, 0)),
                   pl.BlockSpec((8, C2), lambda i: (i, 0))],
        out_shape=[jax.ShapeDtypeStruct((Rp, C2), bf16),
                   jax.ShapeDtypeStruct((nt * 8, C2), f32)],
        compiler_params=cp,
    )(h1_p, p1, w2_mat)
    scale2, shift2 = _fold_bn(st2, R, g2, b2, C2)

    # ---- Epilogue (replaces old Pass C): bn2 + LeakyReLU + NCHW layout --------
    # Purely elementwise + transpose; XLA fuses it, saving one HBM round trip.
    y = h2_p[:R, :planes].astype(f32) * scale2[:planes] + shift2[:planes]
    y = jnp.where(y >= 0, y, LEAKY_SLOPE * y)
    return jnp.transpose(y.reshape(N, Ho, Wo, planes), (0, 3, 1, 2))


# ---------------------------------------------------------------------------
# Pure-JAX reference (mirrors PyTorch forward, training-mode BatchNorm, f32)
# ---------------------------------------------------------------------------
def basic_block_ref(x, w1, g1, b1, w2, g2, b2):
    xp = jnp.pad(x, ((0, 0), (0, 0), (1, 1), (1, 1)), mode="reflect")
    h = jax.lax.conv_general_dilated(
        xp, w1, window_strides=(2, 2), padding="VALID",
        dimension_numbers=("NCHW", "OIHW", "NCHW"))

    def bn(t, g, b):
        mu = t.mean(axis=(0, 2, 3), keepdims=True)
        var = ((t - mu) ** 2).mean(axis=(0, 2, 3), keepdims=True)
        return (t - mu) * jax.lax.rsqrt(var + BN_EPS) * g.reshape(1, -1, 1, 1) \
            + b.reshape(1, -1, 1, 1)

    h = bn(h, g1, b1)
    h = jnp.where(h >= 0, h, LEAKY_SLOPE * h)
    h = jax.lax.conv_general_dilated(
        h, w2, window_strides=(1, 1), padding="VALID",
        dimension_numbers=("NCHW", "OIHW", "NCHW"))
    h = bn(h, g2, b2)
    h = jnp.where(h >= 0, h, LEAKY_SLOPE * h)
    return h


if __name__ == "__main__":
    # BasicBlock(inplanes=4, planes=8): midplanes = 4 // 2 = 2
    N, Cin, H, W = 2, 4, 16, 16
    mid, planes = Cin // 2, 8

    key = jax.random.PRNGKey(0)
    kx, kw1, kw2, kg1, kb1, kg2, kb2 = jax.random.split(key, 7)

    x = jax.random.normal(kx, (N, Cin, H, W), dtype=jnp.float32)
    w1 = 0.1 * jax.random.normal(kw1, (mid, Cin, 3, 3), dtype=jnp.float32)
    w2 = 0.1 * jax.random.normal(kw2, (planes, mid, 1, 1), dtype=jnp.float32)
    g1 = 1.0 + 0.1 * jax.random.normal(kg1, (mid,), dtype=jnp.float32)
    b1 = 0.1 * jax.random.normal(kb1, (mid,), dtype=jnp.float32)
    g2 = 1.0 + 0.1 * jax.random.normal(kg2, (planes,), dtype=jnp.float32)
    b2 = 0.1 * jax.random.normal(kb2, (planes,), dtype=jnp.float32)

    out = basic_block_pallas(x, w1, g1, b1, w2, g2, b2)
    out = jax.block_until_ready(out)

    ref = basic_block_ref(x, w1, g1, b1, w2, g2, b2)
    assert out.shape == (N, planes, (H + 2 - 3) // 2 + 1, (W + 2 - 3) // 2 + 1)
    # Tolerance reflects bf16 MXU operands / bf16 HBM intermediates vs f32 reference.
    assert jnp.allclose(out, ref, rtol=5e-2, atol=5e-2), "mismatch vs reference"

    print("KERNEL_OK")
</pallas_src>

<mosaic_0001>
module attributes {stable_mosaic.version = 11 : i64} {
  func.func @_conv1_stats_kernel(%arg0: i32, %arg1: memref<64x36xbf16, #tpu.memory_space<vmem>>, %arg2: memref<36x2xbf16, #tpu.memory_space<vmem>>, %arg3: memref<64x2xbf16, #tpu.memory_space<vmem>>, %arg4: memref<8x2xf32, #tpu.memory_space<vmem>>) attributes {dimension_semantics = [#tpu.dimension_semantics<parallel>], iteration_bounds = array<i64: 2>, scalar_prefetch = 0 : i64, scratch_operands = 0 : i64, tpu.core_type = #tpu.core_type<tc>, window_params = [{transform_indices = @transform_0, window_bounds = array<i64: 64, 36>}, {pipeline_mode = #tpu.pipeline_mode<synchronous>, transform_indices = @transform_1, window_bounds = array<i64: 36, 2>}, {transform_indices = @transform_2, window_bounds = array<i64: 64, 2>}, {transform_indices = @transform_3, window_bounds = array<i64: 8, 2>}]} {
    %c0 = arith.constant 0 : index
    %c0_0 = arith.constant 0 : index
    %0 = vector.load %arg1[%c0, %c0_0] : memref<64x36xbf16, #tpu.memory_space<vmem>>, vector<64x36xbf16>
    %c0_1 = arith.constant 0 : index
    %c0_2 = arith.constant 0 : index
    %1 = vector.load %arg2[%c0_1, %c0_2] : memref<36x2xbf16, #tpu.memory_space<vmem>>, vector<36x2xbf16>
    %cst = arith.constant dense<0.000000e+00> : vector<64x2xf32>
    %2 = tpu.matmul %0, %1, %cst {dimension_numbers = #tpu.dot_dimension_numbers<[1], [0], [0], [1], [0, 0, 1, 1], [], []>} : vector<64x36xbf16>, vector<36x2xbf16>, vector<64x2xf32> -> vector<64x2xf32>
    %3 = arith.truncf %2 : vector<64x2xf32> to vector<64x2xbf16>
    %c0_3 = arith.constant 0 : index
    %c0_4 = arith.constant 0 : index
    %4 = vector.load %arg3[%c0_3, %c0_4] : memref<64x2xbf16, #tpu.memory_space<vmem>>, vector<64x2xbf16>
    tpu.vector_store %arg3[%c0_3, %c0_4], %3 {strides = array<i32>} : memref<64x2xbf16, #tpu.memory_space<vmem>>, vector<64x2xbf16>,
    %cst_5 = arith.constant dense<0.000000e+00> : vector<2xf32>
    %5 = vector.multi_reduction <add>, %2, %cst_5 [0] : vector<64x2xf32> to vector<2xf32>
    %6 = vector.shape_cast %5 : vector<2xf32> to vector<1x2xf32>
    %c0_6 = arith.constant 0 : index
    %c0_7 = arith.constant 0 : index
    %7 = vector.load %arg4[%c0_6, %c0_7] : memref<8x2xf32, #tpu.memory_space<vmem>>, vector<1x2xf32>
    tpu.vector_store %arg4[%c0_6, %c0_7], %6 {strides = array<i32>} : memref<8x2xf32, #tpu.memory_space<vmem>>, vector<1x2xf32>,
    %8 = arith.mulf %2, %2 : vector<64x2xf32>
    %cst_8 = arith.constant dense<0.000000e+00> : vector<2xf32>
    %9 = vector.multi_reduction <add>, %8, %cst_8 [0] : vector<64x2xf32> to vector<2xf32>
    %10 = vector.shape_cast %9 : vector<2xf32> to vector<1x2xf32>
    %c1 = arith.constant 1 : index
    %c0_9 = arith.constant 0 : index
    %11 = vector.load %arg4[%c1, %c0_9] : memref<8x2xf32, #tpu.memory_space<vmem>>, vector<1x2xf32>
    tpu.vector_store %arg4[%c1, %c0_9], %10 {strides = array<i32>} : memref<8x2xf32, #tpu.memory_space<vmem>>, vector<1x2xf32>,
    return
  }
  func.func @transform_0(%arg0: i32) -> (i32, i32) {
    %c0_i32 = arith.constant 0 : i32
    %c0_i32_0 = arith.constant 0 : i32
    return %arg0, %c0_i32 : i32, i32
  }
  func.func @transform_1(%arg0: i32) -> (i32, i32) {
    %c0_i32 = arith.constant 0 : i32
    %c0_i32_0 = arith.constant 0 : i32
    %c0_i32_1 = arith.constant 0 : i32
    return %c0_i32, %c0_i32_0 : i32, i32
  }
  func.func @transform_2(%arg0: i32) -> (i32, i32) {
    %c0_i32 = arith.constant 0 : i32
    %c0_i32_0 = arith.constant 0 : i32
    return %arg0, %c0_i32 : i32, i32
  }
  func.func @transform_3(%arg0: i32) -> (i32, i32) {
    %c0_i32 = arith.constant 0 : i32
    %c0_i32_0 = arith.constant 0 : i32
    return %arg0, %c0_i32 : i32, i32
  }
}

</mosaic_0001>

<llo_original>
// kernel: tpu_custom_call.1
$region0: #{tpu_custom_call.1}
  #allocation0 [shape = 'u32[]', space=smem, size = 0x4, offset = 0x4, fixed_abs, tag = 'smem constant byte address 0x4 - core index']
  #allocation1 [shape = 'u32[72,128]{1,0:T(1,128)}', space=vmem, size = 0x9000, scoped, tag = 'internal scratch']
  %s0 = inlined_call_operand.vmem [shape: bf16[128,36], index: 0, kind: input, shape index: {}]
  %s1 = inlined_call_operand.vmem [shape: bf16[36,2], index: 1, kind: input, shape index: {}]
  %s2 = inlined_call_operand.vmem [shape: bf16[128,2], index: 2, kind: output, shape index: {0}]
  %s3 = inlined_call_operand.vmem [shape: f32[16,2], index: 3, kind: output, shape index: {1}]
  %4 = xla_tuple %s2, %s3
  %s5 = sld [smem:[#allocation0]]
  $region49: #{tpu_custom_call.1} parent=0
    _
  %s7 = ssub.s32 1, %s5
  %s8 = scalar_select 0, %s7, %s5
  loop: start=0, step=1, limit=4
  $region2: #{tpu_custom_call.1} parent=0 // loop_pre_header
    _
  $region3: #{tpu_custom_call.1} parent=0 // loop_header
    %s10 = sphi 0, %s14
    %p11 = scmp.ge.s32.totalorder %s10, 4
    %s20 = sphi 0, %s22
    %s23 = sphi 0, %s20
    %s24 = sphi 0, %s23
    %s40 = sphi 0, %s24
    %s44 = sphi 0, %s44
    %s46 = sphi 0, %s44
    %s47 = sphi 0, %s46
    %s61 = sphi 0, %s47
    %s67 = sphi 0, %s69
    %s70 = sphi 0, %s67
    %s71 = sphi 0, %s70
    %s87 = sphi 0, %s71
    %s93 = sphi 0, %s95
    %s96 = sphi 0, %s93
    %s97 = sphi 0, %s96
    %s113 = sphi 0, %s97
  $region4: #{tpu_custom_call.1} parent=0 // loop_header_branch
    %13 = sbr.rel (%p11) target = $region8
  $region5: #{tpu_custom_call.1} parent=0 // loop_body
    %s15 = ssub.s32 %s10, 1
    %s16 = ssub.s32 %s10, 2
    %s17 = sadd.s32 %s10, 1
    %s18 = ssub.s32 %s10, %s17
    %p19 = scmp.eq.s32.totalorder %s18, 0
    %s21 = sadd.s32 %s20, 1
    %s22 = scalar_select %p19, %s20, %s21
    %p25 = pneg %p19
    %p26 = scmp.eq.s32.totalorder %s10, 1
    %p27 = por %p25, %p26
    %p28 = scmp.ne.s32.totalorder %s20, %s23
    %p29 = scmp.eq.s32.totalorder %s10, 0
    %p30 = por %p28, %p29
    %p31 = scmp.ne.s32.totalorder %s20, %s23
    %p32 = scmp.eq.s32.totalorder %s15, 1
    %p33 = por %p31, %p32
    %p34 = scmp.ne.s32.totalorder %s23, %s24
    %p35 = scmp.eq.s32.totalorder %s15, 0
    %p36 = por %p34, %p35
    %p37 = scmp.ne.s32.totalorder %s23, %s24
    %p38 = scmp.eq.s32.totalorder %s16, 1
    %p39 = por %p37, %p38
    %p41 = scmp.ne.s32.totalorder %s24, %s40
    %p42 = scmp.eq.s32.totalorder %s16, 0
    %p43 = por %p41, %p42
    %s45 = sadd.s32 %s44, 1
    %p48 = scmp.eq.s32.totalorder %s10, 1
    %p49 = scmp.ne.s32.totalorder %s44, %s46
    %p50 = scmp.eq.s32.totalorder %s10, 0
    %p51 = por %p49, %p50
    %p52 = scmp.ne.s32.totalorder %s44, %s46
    %p53 = scmp.eq.s32.totalorder %s15, 1
    %p54 = por %p52, %p53
    %p55 = scmp.ne.s32.totalorder %s46, %s47
    %p56 = scmp.eq.s32.totalorder %s15, 0
    %p57 = por %p55, %p56
    %p58 = scmp.ne.s32.totalorder %s46, %s47
    %p59 = scmp.eq.s32.totalorder %s16, 1
    %p60 = por %p58, %p59
    %p62 = scmp.ne.s32.totalorder %s47, %s61
    %p63 = scmp.eq.s32.totalorder %s16, 0
    %p64 = por %p62, %p63
    %s65 = ssub.s32 %s10, %s17
    %p66 = scmp.eq.s32.totalorder %s65, 0
    %s68 = sadd.s32 %s67, 1
    %s69 = scalar_select %p66, %s67, %s68
    %p72 = pneg %p66
    %p73 = scmp.eq.s32.totalorder %s10, 1
    %p74 = por %p72, %p73
    %p75 = scmp.ne.s32.totalorder %s67, %s70
    %p76 = scmp.eq.s32.totalorder %s10, 0
    %p77 = por %p75, %p76
    %p78 = scmp.ne.s32.totalorder %s67, %s70
    %p79 = scmp.eq.s32.totalorder %s15, 1
    %p80 = por %p78, %p79
    %p81 = scmp.ne.s32.totalorder %s70, %s71
    %p82 = scmp.eq.s32.totalorder %s15, 0
    %p83 = por %p81, %p82
    %p84 = scmp.ne.s32.totalorder %s70, %s71
    %p85 = scmp.eq.s32.totalorder %s16, 1
    %p86 = por %p84, %p85
    %p88 = scmp.ne.s32.totalorder %s71, %s87
    %p89 = scmp.eq.s32.totalorder %s16, 0
    %p90 = por %p88, %p89
    %s91 = ssub.s32 %s10, %s17
    %p92 = scmp.eq.s32.totalorder %s91, 0
    %s94 = sadd.s32 %s93, 1
    %s95 = scalar_select %p92, %s93, %s94
    %p98 = pneg %p92
    %p99 = scmp.eq.s32.totalorder %s10, 1
    %p100 = por %p98, %p99
    %p101 = scmp.ne.s32.totalorder %s93, %s96
    %p102 = scmp.eq.s32.totalorder %s10, 0
    %p103 = por %p101, %p102
    %p104 = scmp.ne.s32.totalorder %s93, %s96
    %p105 = scmp.eq.s32.totalorder %s15, 1
    %p106 = por %p104, %p105
    %p107 = scmp.ne.s32.totalorder %s96, %s97
    %p108 = scmp.eq.s32.totalorder %s15, 0
    %p109 = por %p107, %p108
    %p110 = scmp.ne.s32.totalorder %s96, %s97
    %p111 = scmp.eq.s32.totalorder %s16, 1
    %p112 = por %p110, %p111
    %p114 = scmp.ne.s32.totalorder %s97, %s113
    %p115 = scmp.eq.s32.totalorder %s16, 0
    %p116 = por %p114, %p115
    %p117 = scmp.le.s32.totalorder 1, %s10
    %p118 = scmp.lt.s32.totalorder %s10, 3
    %p119 = pnand %p117, %p118
    %p120 = pneg %p119
    // Predicated region
    $region9: #{tpu_custom_call.1} parent=5 // pred_check
      _
    $region10: #{tpu_custom_call.1} parent=5 // pred_check_branch
      %122 = sbr.rel (%p119) target = $region12
    $region11: #{tpu_custom_call.1} parent=5 // pred_region
      %s123 = ssub.s32 %s10, 1
      // Predicated region
      $region13: #{tpu_custom_call.1} parent=11 // pred_check
        %p124 = pneg %p57
      $region14: #{tpu_custom_call.1} parent=11 // pred_check_branch
        %126 = sbr.rel (%p124) target = $region16
      $region15: #{tpu_custom_call.1} parent=11 // pred_region
        _
      $region16: #{tpu_custom_call.1} parent=11 // pred_fallthru
        _
    $region12: #{tpu_custom_call.1} parent=5 // pred_fallthru
      _
    %p127 = scmp.lt.s32.totalorder %s10, 2
    // Predicated region
    $region17: #{tpu_custom_call.1} parent=5 // pred_check
      %p128 = pneg %p127
    $region18: #{tpu_custom_call.1} parent=5 // pred_check_branch
      %130 = sbr.rel (%p128) target = $region20
    $region19: #{tpu_custom_call.1} parent=5 // pred_region
      // Predicated region
      $region21: #{tpu_custom_call.1} parent=19 // pred_check
        %p131 = pneg %p30
      $region22: #{tpu_custom_call.1} parent=19 // pred_check_branch
        %133 = sbr.rel (%p131) target = $region24
      $region23: #{tpu_custom_call.1} parent=19 // pred_region
        %s134 = smul.u32 8, %s10
        %p135 = scmp.lt.s32.totalorder %s134, 15
        %s136 = scalar_select %p135, %s134, 15
        %s137 = smul.addr %s136, 4
        %s138 = scalar_lea.vmem %s0, %s137
        %s139 = smul.u32 8, %s10
      $region24: #{tpu_custom_call.1} parent=19 // pred_fallthru
        _
    $region20: #{tpu_custom_call.1} parent=5 // pred_fallthru
      _
    %p140 = scmp.le.s32.totalorder 1, %s10
    %p141 = scmp.lt.s32.totalorder %s10, 3
    %p142 = pnand %p140, %p141
    %p143 = pneg %p142
    // Predicated region
    $region25: #{tpu_custom_call.1} parent=5 // pred_check
      _
    $region26: #{tpu_custom_call.1} parent=5 // pred_check_branch
      %145 = sbr.rel (%p142) target = $region28
    $region27: #{tpu_custom_call.1} parent=5 // pred_region
      %s146 = ssub.s32 %s10, 1
      %s147 = smul.u32 8, %s15
      %p148 = scmp.lt.s32.totalorder %s147, 15
      %s149 = scalar_select %p148, %s147, 15
      %s150 = smul.addr %s149, 4
      %s151 = scalar_lea.vmem %s0, %s150
      %p152 = pneg %p36
      %p153 = pneg %p33
      %p154 = pneg %p57
      %p155 = pneg %p54
      %p156 = pneg %p83
      %p157 = pneg %p80
      %s158 = smul.u32 8, %s15
      %p159 = scmp.lt.s32.totalorder %s158, 15
      %s160 = scalar_select %p159, %s158, 15
      %s161 = smul.addr %s160, 4
      %s162 = scalar_lea.vmem %s2, %s161
      %p163 = pneg %p109
      %p164 = pneg %p106
      %p165 = scmp.lt.s32.totalorder %s15, 1
      %s166 = scalar_select %p165, %s15, 1
      %s167 = smul.addr %s166, 8
      %s168 = scalar_lea.vmem %s3, %s167
      %s169 = smul.u32 8, %s15
      %p170 = scmp.lt.s32.totalorder %s169, 15
      %s171 = scalar_select %p170, %s169, 15
      %s172 = smul.addr %s171, 4
      %s173 = scalar_lea.vmem %s0, %s172
      %s174 = smul.u32 8, %s15
      %s175 = smul.u32 8, %s15
      %p176 = scmp.lt.s32.totalorder %s175, 15
      %s177 = scalar_select %p176, %s175, 15
      %s178 = smul.addr %s177, 4
      %s179 = scalar_lea.vmem %s2, %s178
      %s180 = smul.u32 8, %s15
      %p181 = scmp.lt.s32.totalorder %s15, 1
      %s182 = scalar_select %p181, %s15, 1
      %s183 = smul.addr %s182, 8
      %s184 = scalar_lea.vmem %s3, %s183
      %v186 = vld [vmem:[%s173] sm:$0xf]
      %v187 = vld [vmem:[%s173 + $0x4] sm:$0xf]
      %v188 = vld [vmem:[%s173 + $0x8] sm:$0xf]
      %v189 = vld [vmem:[%s173 + $0xc] sm:$0xf]
      %v190 = vld [vmem:[%s173 + $0x10] sm:$0xf]
      %v191 = vld [vmem:[%s173 + $0x14] sm:$0xf]
      %v192 = vld [vmem:[%s173 + $0x18] sm:$0xf]
      %v193 = vld [vmem:[%s173 + $0x1c] sm:$0xf]
      %v194 = vld [vmem:[%s1] sm:$0xf]
      %v195 = vld [vmem:[%s1 + $0x4] sm:$0xf]
      %v196 = vld [vmem:[%s1 + $0x8] sm:$0xf]
      %v197 = vld [vmem:[%s1 + $0xc] sm:$0xf]
      %v198 = vld [vmem:[%s1 + $0x10] sm:$0x3]
      %v207 = vunpack.c.l.b16 %v186
      %v208 = vunpack.c.l.b16 %v187
      %v209 = vunpack.c.l.b16 %v188
      %v210 = vunpack.c.l.b16 %v189
      %v211 = vunpack.c.l.b16 %v190
      %v212 = vunpack.c.l.b16 %v191
      %v213 = vunpack.c.l.b16 %v192
      %v214 = vunpack.c.l.b16 %v193
      %v215 = vpack.c.b16 %v208, %v207
      %v216 = vpack.c.b16 %v210, %v209
      %v217 = vpack.c.b16 %v212, %v211
      %v218 = vpack.c.b16 %v214, %v213
      %v224 = vunpack.c.l.b16 %v194
      %v225 = vunpack.c.l.b16 %v195
      %v226 = vunpack.c.l.b16 %v196
      %v227 = vunpack.c.l.b16 %v197
      %v228 = vunpack.c.l.b16 %v198
      %v229 = vpack.c.b16 %v225, %v224
      %v230 = vpack.c.b16 %v227, %v226
      %v231 = vpack.c.b16 %v228, %v228
      %vm234 = vcmask 293888
      %v236 = vsel %vm234, %v215, 0
      %v239 = vsel %vm234, %v216, 0
      %v242 = vsel %vm234, %v217, 0
      %v245 = vsel %vm234, %v218, 0
      %vm247 = vcmask 1041408
      %v249 = vsel %vm247, %v231, 0
      %251 = vmatpush.bf16.msra.mxu0 0
      %252 = vmatpush.bf16.msra.mxu0 0
      %253 = vmatpush.bf16.msra.mxu0 0
      %254 = vmatpush.bf16.msra.mxu0 0
      %255 = vmatpush.bf16.msra.mxu0 0
      %256 = vmatpush.bf16.msra.mxu0 %v249
      %257 = vmatpush.bf16.msra.mxu0 %v230
      %258 = vmatpush.bf16.msra.mxu0 %v229
      %259 = vmatmul.bf16.gmra.mxu0 %v236
      %v260 = vpop.f32.mrf.mxu0
      %v261 = vadd.f32 0.0, %v260
      %v262 = vpop.f32.mrf.mxu0
      %v263 = vadd.f32 0.0, %v262
      %264 = vmatmul.bf16.gmra.mxu0 %v239
      %v265 = vpop.f32.mrf.mxu0
      %v266 = vadd.f32 0.0, %v265
      %v267 = vpop.f32.mrf.mxu0
      %v268 = vadd.f32 0.0, %v267
      %269 = vmatmul.bf16.gmra.mxu0 %v242
      %v270 = vpop.f32.mrf.mxu0
      %v271 = vadd.f32 0.0, %v270
      %v272 = vpop.f32.mrf.mxu0
      %v273 = vadd.f32 0.0, %v272
      %274 = vmatmul.bf16.gmra.mxu0 %v245
      %v275 = vpop.f32.mrf.mxu0
      %v276 = vadd.f32 0.0, %v275
      %v277 = vpop.f32.mrf.mxu0
      %v278 = vadd.f32 0.0, %v277
      %279 = vdwg.mxu0
      %v280 = vpack.c.bf16 %v261, %v261
      %v281 = vpack.c.bf16 %v263, %v263
      %v282 = vpack.c.bf16 %v266, %v266
      %v283 = vpack.c.bf16 %v268, %v268
      %v284 = vpack.c.bf16 %v271, %v271
      %v285 = vpack.c.bf16 %v273, %v273
      %v286 = vpack.c.bf16 %v276, %v276
      %v287 = vpack.c.bf16 %v278, %v278
      %vm288 = vcmask 11264
      %289 = vst.msk [vmem:[%s179] sm:$0xf] %vm288, %v280
      %290 = vst.msk [vmem:[%s179 + $0x4] sm:$0xf] %vm288, %v281
      %291 = vst.msk [vmem:[%s179 + $0x8] sm:$0xf] %vm288, %v282
      %292 = vst.msk [vmem:[%s179 + $0xc] sm:$0xf] %vm288, %v283
      %293 = vst.msk [vmem:[%s179 + $0x10] sm:$0xf] %vm288, %v284
      %294 = vst.msk [vmem:[%s179 + $0x14] sm:$0xf] %vm288, %v285
      %295 = vst.msk [vmem:[%s179 + $0x18] sm:$0xf] %vm288, %v286
      %296 = vst.msk [vmem:[%s179 + $0x1c] sm:$0xf] %vm288, %v287
      %vm297 = vcmask 15360
      %v298 = vsel %vm297, %v261, 0.0
      %v299 = vsel %vm297, %v263, 0.0
      %v300 = vadd.f32 %v298, %v299
      %v301 = vsel %vm297, %v266, 0.0
      %v302 = vadd.f32 %v300, %v301
      %v303 = vsel %vm297, %v268, 0.0
      %v304 = vadd.f32 %v302, %v303
      %v305 = vsel %vm297, %v271, 0.0
      %v306 = vadd.f32 %v304, %v305
      %v307 = vsel %vm297, %v273, 0.0
      %v308 = vadd.f32 %v306, %v307
      %v309 = vsel %vm297, %v276, 0.0
      %v310 = vadd.f32 %v308, %v309
      %v311 = vsel %vm297, %v278, 0.0
      %v312 = vadd.f32 %v310, %v311
      %v313 = vrot.slane %v312, 4
      %v314 = vadd.f32 %v312, %v313
      %v315 = vrot.slane %v314, 2
      %v316 = vadd.f32 %v314, %v315
      %v317 = vrot.slane %v316, 1
      %v318 = vadd.f32 %v316, %v317
      %vm319 = vcmask 8192
      %320 = vst.msk [vmem:[%s184] sm:$0x1] %vm319, %v318
      %v321 = vmul.f32 %v261, %v261
      %v322 = vmul.f32 %v263, %v263
      %v323 = vmul.f32 %v266, %v266
      %v324 = vmul.f32 %v268, %v268
      %v325 = vmul.f32 %v271, %v271
      %v326 = vmul.f32 %v273, %v273
      %v327 = vmul.f32 %v276, %v276
      %v328 = vmul.f32 %v278, %v278
      %v329 = vsel %vm297, %v321, 0.0
      %v330 = vsel %vm297, %v322, 0.0
      %v331 = vadd.f32 %v329, %v330
      %v332 = vsel %vm297, %v323, 0.0
      %v333 = vadd.f32 %v331, %v332
      %v334 = vsel %vm297, %v324, 0.0
      %v335 = vadd.f32 %v333, %v334
      %v336 = vsel %vm297, %v325, 0.0
      %v337 = vadd.f32 %v335, %v336
      %v338 = vsel %vm297, %v326, 0.0
      %v339 = vadd.f32 %v337, %v338
      %v340 = vsel %vm297, %v327, 0.0
      %v341 = vadd.f32 %v339, %v340
      %v342 = vsel %vm297, %v328, 0.0
      %v343 = vadd.f32 %v341, %v342
      %v344 = vrot.slane %v343, 4
      %v345 = vadd.f32 %v343, %v344
      %v346 = vrot.slane %v345, 2
      %v347 = vadd.f32 %v345, %v346
      %v348 = vrot.slane %v347, 1
      %v349 = vadd.f32 %v347, %v348
      %350 = vst.msk [vmem:[%s184 + $0x1] sm:$0x1] %vm319, %v349
      %s351 = smul.u32 8, %s15
      %p352 = scmp.lt.s32.totalorder %s351, 15
      %s353 = scalar_select %p352, %s351, 15
      %s354 = smul.addr %s353, 4
      %s355 = scalar_lea.vmem %s2, %s354
      %p356 = scmp.lt.s32.totalorder %s15, 1
      %s357 = scalar_select %p356, %s15, 1
      %s358 = smul.addr %s357, 8
      %s359 = scalar_lea.vmem %s3, %s358
      // Predicated region
      $region29: #{tpu_custom_call.1} parent=27 // pred_check
        %p360 = pneg %p80
      $region30: #{tpu_custom_call.1} parent=27 // pred_check_branch
        %362 = sbr.rel (%p360) target = $region32
      $region31: #{tpu_custom_call.1} parent=27 // pred_region
        %s363 = smul.u32 8, %s15
      $region32: #{tpu_custom_call.1} parent=27 // pred_fallthru
        _
      // Predicated region
      $region33: #{tpu_custom_call.1} parent=27 // pred_check
        %p364 = pneg %p106
      $region34: #{tpu_custom_call.1} parent=27 // pred_check_branch
        %366 = sbr.rel (%p364) target = $region36
      $region35: #{tpu_custom_call.1} parent=27 // pred_region
        _
      $region36: #{tpu_custom_call.1} parent=27 // pred_fallthru
        _
    $region28: #{tpu_custom_call.1} parent=5 // pred_fallthru
      _
    %p367 = scmp.le.s32.totalorder 2, %s10
    // Predicated region
    $region37: #{tpu_custom_call.1} parent=5 // pred_check
      %p368 = pneg %p367
    $region38: #{tpu_custom_call.1} parent=5 // pred_check_branch
      %370 = sbr.rel (%p368) target = $region40
    $region39: #{tpu_custom_call.1} parent=5 // pred_region
      %s371 = ssub.s32 %s10, 2
      // Predicated region
      $region41: #{tpu_custom_call.1} parent=39 // pred_check
        %p372 = pneg %p86
      $region42: #{tpu_custom_call.1} parent=39 // pred_check_branch
        %374 = sbr.rel (%p372) target = $region44
      $region43: #{tpu_custom_call.1} parent=39 // pred_region
        %s375 = smul.u32 8, %s16
        %p376 = scmp.lt.s32.totalorder %s375, 15
        %s377 = scalar_select %p376, %s375, 15
        %s378 = smul.addr %s377, 4
        %s379 = scalar_lea.vmem %s2, %s378
      $region44: #{tpu_custom_call.1} parent=39 // pred_fallthru
        _
      // Predicated region
      $region45: #{tpu_custom_call.1} parent=39 // pred_check
        %p380 = pneg %p112
      $region46: #{tpu_custom_call.1} parent=39 // pred_check_branch
        %382 = sbr.rel (%p380) target = $region48
      $region47: #{tpu_custom_call.1} parent=39 // pred_region
        %p383 = scmp.lt.s32.totalorder %s16, 1
        %s384 = scalar_select %p383, %s16, 1
        %s385 = smul.addr %s384, 8
        %s386 = scalar_lea.vmem %s3, %s385
      $region48: #{tpu_custom_call.1} parent=39 // pred_fallthru
        _
    $region40: #{tpu_custom_call.1} parent=5 // pred_fallthru
      _
  $region6: #{tpu_custom_call.1} parent=0 // loop_footer
    %s14 = sadd.s32 1, %s10
  $region7: #{tpu_custom_call.1} parent=0 // loop_footer_branch
    %9 = sbr.rel target = $region3
  $region8: #{tpu_custom_call.1} parent=0 // loop_exit
    _

</llo_original>
